<compile_context>
chip_gen: v6e
topology: v6e:2x2x1
jax: 0.10.0
libtpu: 0.0.40
codegen_flags: <defaults>
</compile_context>

<pallas_src>
import math

import jax
import jax.numpy as jnp
from jax.experimental import pallas as pl
from jax.experimental.pallas import tpu as pltpu


_SQRT_2_OVER_PI = math.sqrt(2.0 / math.pi)
_VMEM_LIMIT = 48 * 1024 * 1024  # > v5e 16 MiB default, < v7x 64 MiB physical


def _gelu(x):
    # tanh-approximate GELU; deviates from PyTorch's exact-erf nn.GELU() by
    # < 3e-3 absolute and lowers to the EUP tanh slot instead of a long VPU
    # polynomial + divide.
    # TODO(synk): exact erf GELU if bit-level parity with nn.GELU() is needed.
    x3 = x * x * x
    return 0.5 * x * (1.0 + jnp.tanh(_SQRT_2_OVER_PI * (x + 0.044715 * x3)))


def _logits_kernel(x_ref, embt_ref, bias_ref, out_ref):
    # out = x @ E^T + bias   (bf16 operands, f32 accumulation on the MXU).
    # embt_ref is the pre-transposed table tile (K, tn) -> plain matmul.
    logits = jnp.dot(x_ref[...], embt_ref[...],
                     preferred_element_type=jnp.float32) + bias_ref[...]
    out_ref[...] = logits.astype(out_ref.dtype)


def _gelu_linear_kernel(x_ref, wp_ref, bp_ref, h_ref):
    # h = GELU(x @ Wp^T + bp), emitted in bf16 (cast once, not per item tile).
    h = jnp.dot(x_ref[...], wp_ref[...],
                preferred_element_type=jnp.float32) + bp_ref[...]
    h_ref[...] = _gelu(h).astype(h_ref.dtype)


def _round_up(n, m):
    return (n + m - 1) // m * m


def _pick_tile(total, max_tile, align):
    """Largest multiple of `align` that divides `total` and is <= max_tile."""
    cand = min(max_tile, total)
    cand = max(cand - cand % align, align)
    while total % cand != 0:
        cand -= align
    return cand


def prepare_prediction_params(item_embeddings, item_bias, *, w_p_weight=None,
                              w_p_bias=None, as_code=True):
    """One-time preparation of the static parameters (hoisted out of forward).

    Pads the vocab axis to a multiple of 128, transposes the table to
    (e_dim, n_items_padded) and casts the matmul operands to bf16 exactly once.
    """
    item_embeddings = jnp.asarray(item_embeddings, jnp.float32)
    n_items, e_dim = item_embeddings.shape
    np_items = _round_up(n_items, 128)

    emb_t = jnp.pad(item_embeddings, ((0, np_items - n_items), (0, 0))).T
    emb_t = emb_t.astype(jnp.bfloat16)                       # (e_dim, np_items)
    bias_p = jnp.pad(jnp.asarray(item_bias, jnp.float32),
                     (0, np_items - n_items)).reshape(1, np_items)

    params = {"as_code": as_code, "n_items": n_items,
              "emb_t": emb_t, "bias": bias_p}
    if not as_code:
        params["wp_t"] = jnp.asarray(w_p_weight, jnp.float32).T \
                            .astype(jnp.bfloat16)            # (in_dim, out_dim)
        params["bp"] = jnp.asarray(w_p_bias, jnp.float32).reshape(1, -1)
    return params


def prediction_forward(x, params, pred_idx=None, *, row_tile=512,
                       item_tile=512, out_dtype=jnp.float32):
    """Forward of bert4rec `Prediction` (eval mode) as Pallas TPU kernels.

    x:        (..., in_dim) float32
    params:   output of prepare_prediction_params (cached bf16 table etc.)
    pred_idx: optional integer indices gathered along axis 0 before the kernel
              (matches `x = x[pred_idx]`).
    out_dtype: f32 matches the PyTorch module; pass jnp.bfloat16 to halve the
              output HBM traffic if downstream allows.
    """
    if pred_idx is not None:
        x = x[pred_idx]                       # row gather outside the kernel

    lead_shape = x.shape[:-1]
    in_dim = x.shape[-1]
    x2 = x.reshape(-1, in_dim)
    m = x2.shape[0]

    emb_t = params["emb_t"]                   # (e_dim, np_items) bf16
    bias_p = params["bias"]                   # (1, np_items) f32
    n_items = params["n_items"]
    e_dim, np_items = emb_t.shape

    # Minimal padding: rows to a multiple of 8, items already padded to 128 at
    # prep time.  Tiles are chosen to divide the padded extents exactly so the
    # final slice is a no-op when no padding was needed.
    mp = _round_up(max(m, 1), 8)
    tm = _pick_tile(mp, row_tile, 8)
    tn = _pick_tile(np_items, item_tile, 128)

    x_p = x2 if mp == m else jnp.pad(x2, ((0, mp - m), (0, 0)))
    x_p = x_p.astype(jnp.bfloat16)

    if not params["as_code"]:
        # Small pre-pass: h = GELU(x @ Wp^T + bp) in bf16, row-tiled only.
        wp_t = params["wp_t"]
        bp = params["bp"]
        out_dim = wp_t.shape[1]
        x_p = pl.pallas_call(
            _gelu_linear_kernel,
            out_shape=jax.ShapeDtypeStruct((mp, out_dim), jnp.bfloat16),
            grid=(mp // tm,),
            in_specs=[pl.BlockSpec((tm, in_dim), lambda i: (i, 0)),
                      pl.BlockSpec((in_dim, out_dim), lambda i: (0, 0)),
                      pl.BlockSpec((1, out_dim), lambda i: (0, 0))],
            out_specs=pl.BlockSpec((tm, out_dim), lambda i: (i, 0)),
            compiler_params=pltpu.CompilerParams(
                dimension_semantics=("parallel",),
                vmem_limit_bytes=_VMEM_LIMIT),
        )(x_p, wp_t, bp)

    if x_p.shape[1] != e_dim:
        raise ValueError(f"contraction-dim mismatch: {x_p.shape[1]} vs {e_dim}")

    # Big matmul: item-outer / row-inner grid so each embedding tile is loaded
    # from HBM exactly once; the (small) x tile is the re-streamed operand.
    out_itemsize = jnp.dtype(out_dtype).itemsize
    cost = pl.CostEstimate(
        flops=2 * mp * np_items * e_dim,
        transcendentals=0,
        bytes_accessed=(mp * e_dim * 2 + e_dim * np_items * 2
                        + mp * np_items * out_itemsize))

    out = pl.pallas_call(
        _logits_kernel,
        out_shape=jax.ShapeDtypeStruct((mp, np_items), out_dtype),
        grid=(np_items // tn, mp // tm),          # (item tiles, row tiles)
        in_specs=[pl.BlockSpec((tm, e_dim), lambda jt, it: (it, 0)),
                  pl.BlockSpec((e_dim, tn), lambda jt, it: (0, jt)),
                  pl.BlockSpec((1, tn), lambda jt, it: (0, jt))],
        out_specs=pl.BlockSpec((tm, tn), lambda jt, it: (it, jt)),
        compiler_params=pltpu.CompilerParams(
            dimension_semantics=("parallel", "parallel"),
            vmem_limit_bytes=_VMEM_LIMIT),
        cost_estimate=cost,
    )(x_p, emb_t, bias_p)

    if mp != m or np_items != n_items:
        out = out[:m, :n_items]                   # no-op when nothing padded
    return out.reshape(*lead_shape, n_items)


def reference_forward(x, item_embeddings, item_bias, *, w_p_weight=None,
                      w_p_bias=None, as_code=True, pred_idx=None):
    # Pure-JAX mirror of the PyTorch forward (eval mode, exact-erf GELU).
    if pred_idx is not None:
        x = x[pred_idx]
    if as_code:
        return x @ item_embeddings.T + item_bias
    h = jax.nn.gelu(x @ w_p_weight.T + w_p_bias, approximate=False)
    return h @ item_embeddings.T + item_bias


if __name__ == "__main__":
    B, F, IN_DIM, OUT_DIM, N_ITEMS = 2, 8, 32, 32, 512

    key = jax.random.PRNGKey(0)
    ks = jax.random.split(key, 6)
    x = jax.random.normal(ks[0], (B, F, IN_DIM), jnp.float32)
    emb_code = jax.random.normal(ks[1], (N_ITEMS, IN_DIM), jnp.float32) / math.sqrt(IN_DIM)
    emb_mlp = jax.random.normal(ks[2], (N_ITEMS, OUT_DIM), jnp.float32) / math.sqrt(OUT_DIM)
    item_bias = jax.random.normal(ks[3], (N_ITEMS,), jnp.float32) * 0.02
    wp_w = jax.random.normal(ks[4], (OUT_DIM, IN_DIM), jnp.float32) / math.sqrt(IN_DIM)
    wp_b = jax.random.normal(ks[5], (OUT_DIM,), jnp.float32) * 0.02

    # Static parameters prepared once (padded, transposed, bf16-cast table).
    params_code = prepare_prediction_params(emb_code, item_bias, as_code=True)
    params_mlp = prepare_prediction_params(emb_mlp, item_bias,
                                           w_p_weight=wp_w, w_p_bias=wp_b,
                                           as_code=False)

    # as_code=True path (module default):  x @ E^T + bias
    out_code = jax.block_until_ready(prediction_forward(x, params_code))
    ref_code = reference_forward(x, emb_code, item_bias, as_code=True)
    assert out_code.shape == (B, F, N_ITEMS)
    assert jnp.allclose(out_code, ref_code, rtol=2e-2, atol=2e-2), (
        f"as_code max abs err {jnp.max(jnp.abs(out_code - ref_code))}")

    # as_code=False path:  GELU(Linear(x)) @ E^T + bias
    out_mlp = jax.block_until_ready(prediction_forward(x, params_mlp))
    ref_mlp = reference_forward(x, emb_mlp, item_bias, w_p_weight=wp_w,
                                w_p_bias=wp_b, as_code=False)
    assert out_mlp.shape == (B, F, N_ITEMS)
    assert jnp.allclose(out_mlp, ref_mlp, rtol=2e-2, atol=2e-2), (
        f"mlp max abs err {jnp.max(jnp.abs(out_mlp - ref_mlp))}")

    # pred_idx path: gather a few flattened positions before the kernel.
    x_flat = x.reshape(B * F, IN_DIM)
    pred_idx = jnp.array([1, 5, 9, 14], jnp.int32)
    out_idx = jax.block_until_ready(
        prediction_forward(x_flat, params_code, pred_idx=pred_idx))
    ref_idx = reference_forward(x_flat, emb_code, item_bias, as_code=True,
                                pred_idx=pred_idx)
    assert out_idx.shape == (4, N_ITEMS)
    assert jnp.allclose(out_idx, ref_idx, rtol=2e-2, atol=2e-2), (
        f"pred_idx max abs err {jnp.max(jnp.abs(out_idx - ref_idx))}")

    print("KERNEL_OK")
</pallas_src>

<mosaic_0001>
module attributes {stable_mosaic.version = 11 : i64} {
  func.func @_logits_kernel(%arg0: i32, %arg1: i32, %arg2: memref<16x32xbf16, #tpu.memory_space<vmem>>, %arg3: memref<32x512xbf16, #tpu.memory_space<vmem>>, %arg4: memref<1x512xf32, #tpu.memory_space<vmem>>, %arg5: memref<16x512xf32, #tpu.memory_space<vmem>>) attributes {dimension_semantics = [#tpu.dimension_semantics<parallel>, #tpu.dimension_semantics<parallel>], iteration_bounds = array<i64: 1, 1>, scalar_prefetch = 0 : i64, scratch_operands = 0 : i64, tpu.core_type = #tpu.core_type<tc>, window_params = [{transform_indices = @transform_0, window_bounds = array<i64: 16, 32>}, {transform_indices = @transform_1, window_bounds = array<i64: 32, 512>}, {transform_indices = @transform_2, window_bounds = array<i64: 1, 512>}, {transform_indices = @transform_3, window_bounds = array<i64: 16, 512>}]} {
    %c0 = arith.constant 0 : index
    %c0_0 = arith.constant 0 : index
    %0 = vector.load %arg2[%c0, %c0_0] : memref<16x32xbf16, #tpu.memory_space<vmem>>, vector<16x32xbf16>
    %c0_1 = arith.constant 0 : index
    %c0_2 = arith.constant 0 : index
    %1 = vector.load %arg3[%c0_1, %c0_2] : memref<32x512xbf16, #tpu.memory_space<vmem>>, vector<32x512xbf16>
    %cst = arith.constant dense<0.000000e+00> : vector<16x512xf32>
    %2 = tpu.matmul %0, %1, %cst {dimension_numbers = #tpu.dot_dimension_numbers<[1], [0], [0], [1], [0, 0, 1, 1], [], []>} : vector<16x32xbf16>, vector<32x512xbf16>, vector<16x512xf32> -> vector<16x512xf32>
    %c0_3 = arith.constant 0 : index
    %c0_4 = arith.constant 0 : index
    %3 = vector.load %arg4[%c0_3, %c0_4] : memref<1x512xf32, #tpu.memory_space<vmem>>, vector<1x512xf32>
    %4 = vector.broadcast %3 : vector<1x512xf32> to vector<16x512xf32>
    %5 = arith.addf %2, %4 : vector<16x512xf32>
    %c0_5 = arith.constant 0 : index
    %c0_6 = arith.constant 0 : index
    %6 = vector.load %arg5[%c0_5, %c0_6] : memref<16x512xf32, #tpu.memory_space<vmem>>, vector<16x512xf32>
    tpu.vector_store %arg5[%c0_5, %c0_6], %5 {strides = array<i32>} : memref<16x512xf32, #tpu.memory_space<vmem>>, vector<16x512xf32>,
    return
  }
  func.func @transform_0(%arg0: i32, %arg1: i32) -> (i32, i32) {
    %c0_i32 = arith.constant 0 : i32
    %c0_i32_0 = arith.constant 0 : i32
    return %arg1, %c0_i32 : i32, i32
  }
  func.func @transform_1(%arg0: i32, %arg1: i32) -> (i32, i32) {
    %c0_i32 = arith.constant 0 : i32
    %c0_i32_0 = arith.constant 0 : i32
    return %c0_i32, %arg0 : i32, i32
  }
  func.func @transform_2(%arg0: i32, %arg1: i32) -> (i32, i32) {
    %c0_i32 = arith.constant 0 : i32
    %c0_i32_0 = arith.constant 0 : i32
    return %c0_i32, %arg0 : i32, i32
  }
  func.func @transform_3(%arg0: i32, %arg1: i32) -> (i32, i32) {
    %c0_i32 = arith.constant 0 : i32
    return %arg1, %arg0 : i32, i32
  }
}

</mosaic_0001>

<llo_original>
// kernel: tpu_custom_call.1
$region0: #{tpu_custom_call.1}
  #allocation0 [shape = 'u32[]', space=smem, size = 0x4, offset = 0x4, fixed_abs, tag = 'smem constant byte address 0x4 - core index']
  #allocation1 [shape = 'u32[144,128]{1,0:T(1,128)}', space=vmem, size = 0x12000, scoped, tag = 'internal scratch']
  %s0 = inlined_call_operand.hbm [shape: bf16[16,32], index: 0, kind: input, shape index: {}]
  %s1 = inlined_call_operand.hbm [shape: bf16[32,512], index: 1, kind: input, shape index: {}]
  %s2 = inlined_call_operand.hbm [shape: f32[1,512], index: 2, kind: input, shape index: {}]
  %s3 = inlined_call_operand.hbm [shape: f32[16,512], index: 3, kind: output, shape index: {}]
  %s4 = sld [smem:[#allocation0]]
  $region34: #{tpu_custom_call.1} parent=0
    _
  %s6 = ssub.s32 1, %s4
  %s7 = scalar_select 0, %s6, %s4
  $region1: #{tpu_custom_call.1} parent=0
    #allocation2 [shape = 'u8[4096]{0}', space=vmem, size = 0x1000, scoped, tag = 'input window, operand 0, single buffered']
    #allocation3 [shape = 's32[1]{0}', space=sflag, size = 0x4, scoped, tag = 'scoped memory for tpu_custom_call.1']
    #allocation4 [shape = 's32[1]{0}', space=sflag, size = 0x4, scoped, tag = 'scoped memory for tpu_custom_call.1']
    #allocation5 [shape = 'u8[32768]{0}', space=vmem, size = 0x8000, scoped, tag = 'input window, operand 1, single buffered']
    #allocation6 [shape = 's32[1]{0}', space=sflag, size = 0x4, scoped, tag = 'scoped memory for tpu_custom_call.1']
    #allocation7 [shape = 'u8[2048]{0}', space=vmem, size = 0x800, scoped, tag = 'input window, operand 2, single buffered']
    #allocation8 [shape = 'u8[32768]{0}', space=vmem, size = 0x8000, scoped, tag = 'output window, operand 0, single buffered']
    %8 = vsyncpa [#allocation3], 0
    %9 = vsyncpa [#allocation6], 0
    %10 = vsyncpa [#allocation4], 0
    // Predicated region
    $region2: #{tpu_custom_call.1} parent=1 // pred_check
      _
    $region3: #{tpu_custom_call.1} parent=1 // pred_check_branch
      %12 = sbr.rel (0) target = $region5
    $region4: #{tpu_custom_call.1} parent=1 // pred_region
      %s14 = ssub.s32 128, 128
      %15 = vsyncadd [#allocation3], %s14
      %s16 = sshll.u32 [#allocation2], 4
      %s17 = int_to_ptr.vmem [resolvable:$true] %s16
      %22 = dma.hbm_to_vmem [thread:$0]  %s0, 128, %s17, [#allocation3], 64, 64, 4
    $region5: #{tpu_custom_call.1} parent=1 // pred_fallthru
      _
    // Predicated region
    $region6: #{tpu_custom_call.1} parent=1 // pred_check
      _
    $region7: #{tpu_custom_call.1} parent=1 // pred_check_branch
      %24 = sbr.rel (0) target = $region9
    $region8: #{tpu_custom_call.1} parent=1 // pred_region
      %s26 = ssub.s32 1024, 1024
      %27 = vsyncadd [#allocation6], %s26
      %s28 = sshll.u32 [#allocation5], 4
      %s29 = int_to_ptr.vmem [resolvable:$true] %s28
      %34 = dma.hbm_to_vmem [thread:$0]  %s1, 1024, %s29, [#allocation6], 256, 256, 16
    $region9: #{tpu_custom_call.1} parent=1 // pred_fallthru
      _
    // Predicated region
    $region10: #{tpu_custom_call.1} parent=1 // pred_check
      _
    $region11: #{tpu_custom_call.1} parent=1 // pred_check_branch
      %36 = sbr.rel (0) target = $region13
    $region12: #{tpu_custom_call.1} parent=1 // pred_region
      %s38 = ssub.s32 64, 64
      %39 = vsyncadd [#allocation6], %s38
      %s41 = sshll.u32 [#allocation7], 4
      %s42 = int_to_ptr.vmem [resolvable:$true] %s41
      %44 = dma.hbm_to_vmem [thread:$0]  %s2, 64, %s42, [#allocation6]
    $region13: #{tpu_custom_call.1} parent=1 // pred_fallthru
      _
    // Predicated region
    $region14: #{tpu_custom_call.1} parent=1 // pred_check
      _
    $region15: #{tpu_custom_call.1} parent=1 // pred_check_branch
      %46 = sbr.rel (0) target = $region17
    $region16: #{tpu_custom_call.1} parent=1 // pred_region
      %47 = dma.done [#allocation3], 128
    $region17: #{tpu_custom_call.1} parent=1 // pred_fallthru
      _
    // Predicated region
    $region18: #{tpu_custom_call.1} parent=1 // pred_check
      _
    $region19: #{tpu_custom_call.1} parent=1 // pred_check_branch
      %49 = sbr.rel (0) target = $region21
    $region20: #{tpu_custom_call.1} parent=1 // pred_region
      %50 = dma.done [#allocation6], 1024
    $region21: #{tpu_custom_call.1} parent=1 // pred_fallthru
      _
    // Predicated region
    $region22: #{tpu_custom_call.1} parent=1 // pred_check
      _
    $region23: #{tpu_custom_call.1} parent=1 // pred_check_branch
      %52 = sbr.rel (0) target = $region25
    $region24: #{tpu_custom_call.1} parent=1 // pred_region
      %53 = dma.done [#allocation6], 64
    $region25: #{tpu_custom_call.1} parent=1 // pred_fallthru
      _
    %v55 = vld [vmem:[#allocation2] sm:$0xf]
    %v56 = vld [vmem:[#allocation2 + $0x4] sm:$0xf]
    %v57 = vld [vmem:[#allocation5] sm:$0xff]
    %v58 = vld [vmem:[#allocation5 + $0x8] sm:$0xff]
    %v59 = vld [vmem:[#allocation5 + $0x10] sm:$0xff]
    %v60 = vld [vmem:[#allocation5 + $0x18] sm:$0xff]
    %v61 = vld [vmem:[#allocation5 + $0x20] sm:$0xff]
    %v62 = vld [vmem:[#allocation5 + $0x28] sm:$0xff]
    %v63 = vld [vmem:[#allocation5 + $0x30] sm:$0xff]
    %v64 = vld [vmem:[#allocation5 + $0x38] sm:$0xff]
    %v65 = vld [vmem:[#allocation7] sm:$0xf]
    %v67 = vlaneseq
    %v68 = vshrl.u32 %v67, 7
    %v69 = vsub.s32 0, %v68
    %v70 = vrot.slane %v65, %v69
    %v71 = vlaneseq
    %v72 = vshrl.u32 %v71, 7
    %v73 = vsub.s32 1, %v72
    %v74 = vrot.slane %v65, %v73
    %v75 = vlaneseq
    %v76 = vshrl.u32 %v75, 7
    %v77 = vsub.s32 2, %v76
    %v78 = vrot.slane %v65, %v77
    %v79 = vlaneseq
    %v80 = vshrl.u32 %v79, 7
    %v81 = vsub.s32 3, %v80
    %v82 = vrot.slane %v65, %v81
    %v89 = vunpack.c.l.b16 %v55
    %v90 = vunpack.c.l.b16 %v56
    %v91 = vpack.c.b16 %v90, %v89
    %v100 = vunpack.c.l.b16 %v57
    %v101 = vunpack.c.h.b16 %v57
    %v102 = vunpack.c.l.b16 %v58
    %v103 = vunpack.c.h.b16 %v58
    %v104 = vunpack.c.l.b16 %v59
    %v105 = vunpack.c.h.b16 %v59
    %v106 = vunpack.c.l.b16 %v60
    %v107 = vunpack.c.h.b16 %v60
    %v108 = vunpack.c.l.b16 %v61
    %v109 = vunpack.c.h.b16 %v61
    %v110 = vunpack.c.l.b16 %v62
    %v111 = vunpack.c.h.b16 %v62
    %v112 = vunpack.c.l.b16 %v63
    %v113 = vunpack.c.h.b16 %v63
    %v114 = vunpack.c.l.b16 %v64
    %v115 = vunpack.c.h.b16 %v64
    %v116 = vpack.c.b16 %v104, %v100
    %v117 = vpack.c.b16 %v105, %v101
    %v118 = vpack.c.b16 %v106, %v102
    %v119 = vpack.c.b16 %v107, %v103
    %v120 = vpack.c.b16 %v112, %v108
    %v121 = vpack.c.b16 %v113, %v109
    %v122 = vpack.c.b16 %v114, %v110
    %v123 = vpack.c.b16 %v115, %v111
    %vm132 = vcmask 261120
    %v134 = vsel %vm132, %v91, 0
    %136 = vmatprep.subr.bf16.mxu0 0
    %137 = vmatpush1.bf16.msra.mxu0 0
    %138 = vmatprep.subr.bf16.mxu0 0
    %139 = vmatpush1.bf16.msra.mxu0 0
    %140 = vmatprep.subr.bf16.mxu0 0
    %141 = vmatpush1.bf16.msra.mxu0 0
    %142 = vmatprep.subr.bf16.mxu0 0
    %143 = vmatpush1.bf16.msra.mxu0 0
    %144 = vmatprep.subr.bf16.mxu0 0
    %145 = vmatpush1.bf16.msra.mxu0 0
    %146 = vmatprep.subr.bf16.mxu0 0
    %147 = vmatpush1.bf16.msra.mxu0 0
    %148 = vmatprep.subr.bf16.mxu0 %v121
    %149 = vmatpush1.bf16.msra.mxu0 %v120
    %150 = vmatprep.subr.bf16.mxu0 %v117
    %151 = vmatpush1.bf16.msra.mxu0 %v116
    %152 = vmatprep.subr.bf16.mxu0 0
    %153 = vmatpush2.bf16.msra.mxu0 0
    %154 = vmatprep.subr.bf16.mxu0 0
    %155 = vmatpush2.bf16.msra.mxu0 0
    %156 = vmatprep.subr.bf16.mxu0 0
    %157 = vmatpush2.bf16.msra.mxu0 0
    %158 = vmatprep.subr.bf16.mxu0 0
    %159 = vmatpush2.bf16.msra.mxu0 0
    %160 = vmatprep.subr.bf16.mxu0 0
    %161 = vmatpush2.bf16.msra.mxu0 0
    %162 = vmatprep.subr.bf16.mxu0 0
    %163 = vmatpush2.bf16.msra.mxu0 0
    %164 = vmatprep.subr.bf16.mxu0 0
    %165 = vmatpush2.bf16.msra.mxu0 0
    %166 = vmatprep.subr.bf16.mxu0 0
    %167 = vmatpush2.bf16.msra.mxu0 0
    %168 = vmatprep.mubr.bf16.mxu0 0
    %169 = vmatmul.mubr.bf16.gmra.mxu0 %v134
    %v170 = vpop.f32.mrf.mxu0
    %v171 = vadd.f32 %v70, %v170
    %v172 = vpop.f32.mrf.mxu0
    %v173 = vadd.f32 %v74, %v172
    %v174 = vpop.f32.mrf.mxu0
    %v175 = vadd.f32 %v70, %v174
    %v176 = vpop.f32.mrf.mxu0
    %v177 = vadd.f32 %v74, %v176
    %178 = vdwg.mxu0
    %179 = vmatprep.subr.bf16.mxu0 0
    %180 = vmatpush1.bf16.msra.mxu0 0
    %181 = vmatprep.subr.bf16.mxu0 0
    %182 = vmatpush1.bf16.msra.mxu0 0
    %183 = vmatprep.subr.bf16.mxu0 0
    %184 = vmatpush1.bf16.msra.mxu0 0
    %185 = vmatprep.subr.bf16.mxu0 0
    %186 = vmatpush1.bf16.msra.mxu0 0
    %187 = vmatprep.subr.bf16.mxu0 0
    %188 = vmatpush1.bf16.msra.mxu0 0
    %189 = vmatprep.subr.bf16.mxu0 0
    %190 = vmatpush1.bf16.msra.mxu0 0
    %191 = vmatprep.subr.bf16.mxu0 %v123
    %192 = vmatpush1.bf16.msra.mxu0 %v122
    %193 = vmatprep.subr.bf16.mxu0 %v119
    %194 = vmatpush1.bf16.msra.mxu0 %v118
    %195 = vmatprep.subr.bf16.mxu0 0
    %196 = vmatpush2.bf16.msra.mxu0 0
    %197 = vmatprep.subr.bf16.mxu0 0
    %198 = vmatpush2.bf16.msra.mxu0 0
    %199 = vmatprep.subr.bf16.mxu0 0
    %200 = vmatpush2.bf16.msra.mxu0 0
    %201 = vmatprep.subr.bf16.mxu0 0
    %202 = vmatpush2.bf16.msra.mxu0 0
    %203 = vmatprep.subr.bf16.mxu0 0
    %204 = vmatpush2.bf16.msra.mxu0 0
    %205 = vmatprep.subr.bf16.mxu0 0
    %206 = vmatpush2.bf16.msra.mxu0 0
    %207 = vmatprep.subr.bf16.mxu0 0
    %208 = vmatpush2.bf16.msra.mxu0 0
    %209 = vmatprep.subr.bf16.mxu0 0
    %210 = vmatpush2.bf16.msra.mxu0 0
    %211 = vmatprep.mubr.bf16.mxu0 0
    %212 = vmatmul.mubr.bf16.gmra.mxu0 %v134
    %v213 = vpop.f32.mrf.mxu0
    %v214 = vadd.f32 %v78, %v213
    %v215 = vpop.f32.mrf.mxu0
    %v216 = vadd.f32 %v82, %v215
    %v217 = vpop.f32.mrf.mxu0
    %v218 = vadd.f32 %v78, %v217
    %v219 = vpop.f32.mrf.mxu0
    %v220 = vadd.f32 %v82, %v219
    %221 = vdwg.mxu0
    %222 = vst [vmem:[#allocation8] sm:$0xff] %v171
    %223 = vst [vmem:[#allocation8 + $0x8] sm:$0xff] %v173
    %224 = vst [vmem:[#allocation8 + $0x10] sm:$0xff] %v214
    %225 = vst [vmem:[#allocation8 + $0x18] sm:$0xff] %v216
    %226 = vst [vmem:[#allocation8 + $0x20] sm:$0xff] %v175
    %227 = vst [vmem:[#allocation8 + $0x28] sm:$0xff] %v177
    %228 = vst [vmem:[#allocation8 + $0x30] sm:$0xff] %v218
    %229 = vst [vmem:[#allocation8 + $0x38] sm:$0xff] %v220
    // Predicated region
    $region26: #{tpu_custom_call.1} parent=1 // pred_check
      _
    $region27: #{tpu_custom_call.1} parent=1 // pred_check_branch
      %231 = sbr.rel (0) target = $region29
    $region28: #{tpu_custom_call.1} parent=1 // pred_region
      %s233 = ssub.s32 1024, 1024
      %234 = vsyncadd [#allocation4], %s233
      %s235 = sshll.u32 [#allocation8], 4
      %s236 = int_to_ptr.vmem [resolvable:$true] %s235
      %241 = dma.vmem_to_hbm [thread:$0]  %s236, 1024, %s3, [#allocation4], 512, 512, 32
    $region29: #{tpu_custom_call.1} parent=1 // pred_fallthru
      _
    // Predicated region
    $region30: #{tpu_custom_call.1} parent=1 // pred_check
      _
    $region31: #{tpu_custom_call.1} parent=1 // pred_check_branch
      %243 = sbr.rel (0) target = $region33
    $region32: #{tpu_custom_call.1} parent=1 // pred_region
      %244 = dma.done [#allocation4], 1024
    $region33: #{tpu_custom_call.1} parent=1 // pred_fallthru
      _
    %245 = vsyncpa [#allocation3], 1
    %246 = vsyncpa [#allocation6], 1
    %247 = vsyncpa [#allocation4], 1

</llo_original>
